<compile_context>
chip_gen: v6e
topology: v6e:2x2x1
jax: 0.10.0
libtpu: 0.0.40
codegen_flags: <defaults>
</compile_context>

<pallas_src>
import functools

import jax
import jax.numpy as jnp
import numpy as np
from jax.experimental import pallas as pl
from jax.experimental.pallas import tpu as pltpu

_MAX_TILE_ROWS = 2048   # multiple of 32 (int8 sublane quantum); ~9 MiB VMEM @F=13
_ACC_ROWS = 8           # one f32 sublane group per accumulator slab


def _round_up(x, m):
    return -(-x // m) * m


# ----------------------------------------------------------------------------
# Kernel
# ----------------------------------------------------------------------------
def _accumulate_stream(pre_ref, tgt_ref, msk_ref, acc_ref, *, n_tiles, grid_len):
    """Accumulate (sum|d|, sum d^2) for one stream's current row tile."""

    def body():
        # Widen in-kernel (free VPU op; no-op for f32 inputs).
        d = pre_ref[...].astype(jnp.float32) - tgt_ref[...].astype(jnp.float32)
        m = msk_ref[...].astype(jnp.float32)
        # jnp.where (select, NOT multiply): the last pre/tgt block may extend
        # past the array and contain unspecified VMEM garbage (possibly
        # NaN/Inf); the mask stream is exactly sized with a zero tail, and the
        # select blocks any propagation.  Also folds the feature-selection
        # mask in a single op (review item #3).
        dm = jnp.where(m != 0.0, d, 0.0)

        rows, f = dm.shape
        g = rows // _ACC_ROWS
        # Sublane-group partial sums (pure VPU elementwise adds) into a tiny
        # accumulator -> no full-tile accumulator read-modify-write traffic.
        acc_ref[0] += jnp.sum(jnp.abs(dm).reshape(g, _ACC_ROWS, f), axis=0)
        acc_ref[1] += jnp.sum((dm * dm).reshape(g, _ACC_ROWS, f), axis=0)

    if n_tiles == grid_len:          # stream spans the whole grid: no gate
        body()
    else:                            # shorter stream: skip exhausted steps
        pl.when(pl.program_id(0) < n_tiles)(body)


def _fused_stats_kernel(node_pre_ref, node_tgt_ref, node_msk_ref,
                        edge_pre_ref, edge_tgt_ref, edge_msk_ref,
                        out_ref, node_acc_ref, edge_acc_ref,
                        *, n_node_tiles, n_edge_tiles, grid_len):
    i = pl.program_id(0)

    @pl.when(i == 0)
    def _init():
        node_acc_ref[...] = jnp.zeros_like(node_acc_ref)
        edge_acc_ref[...] = jnp.zeros_like(edge_acc_ref)

    _accumulate_stream(node_pre_ref, node_tgt_ref, node_msk_ref, node_acc_ref,
                       n_tiles=n_node_tiles, grid_len=grid_len)
    _accumulate_stream(edge_pre_ref, edge_tgt_ref, edge_msk_ref, edge_acc_ref,
                       n_tiles=n_edge_tiles, grid_len=grid_len)

    @pl.when(i == pl.num_programs(0) - 1)
    def _finalize():
        # Single cross-lane reduce of the tiny accumulators, once per call.
        out_ref[0] = jnp.sum(node_acc_ref[0])   # node sum |d|
        out_ref[1] = jnp.sum(node_acc_ref[1])   # node sum d^2
        out_ref[2] = jnp.sum(edge_acc_ref[0])   # edge sum |d|
        out_ref[3] = jnp.sum(edge_acc_ref[1])   # edge sum d^2


# ----------------------------------------------------------------------------
# Wrapper glue
# ----------------------------------------------------------------------------
def _exact_mask_stream(table_bool, types, n_rows_padded):
    """int8 [n_rows_padded, F] mask whose tail rows are exactly zero.

    Only the tiny per-row type vector is padded (with a sentinel pointing at an
    appended all-false table row), so the cost is O(rows), not O(elements).
    """
    tbl = jnp.concatenate(
        [jnp.asarray(table_bool).astype(jnp.int8),
         jnp.zeros((1, table_bool.shape[1]), jnp.int8)], axis=0)
    sentinel = table_bool.shape[0]
    types_p = jnp.pad(types, (0, n_rows_padded - types.shape[0]),
                      constant_values=sentinel)
    return tbl[types_p]


def _as_tpu_float(x):
    # TPU Pallas has no f64; bf16/f16 are streamed as-is and widened in-kernel.
    return x.astype(jnp.float32) if x.dtype == jnp.float64 else x


@jax.jit
def hamil_loss_abs(node_feats, ref_node_feats, atom_type,
                   edge_feats, ref_edge_feats, edge_type,
                   mask_to_nrme, mask_to_erme):
    node_pre = _as_tpu_float(node_feats)
    node_tgt = _as_tpu_float(ref_node_feats)
    edge_pre = _as_tpu_float(edge_feats)
    edge_tgt = _as_tpu_float(ref_edge_feats)

    n_nodes, f_node = node_pre.shape
    n_edges, f_edge = edge_pre.shape
    atom_t = atom_type.reshape(-1).astype(jnp.int32)
    edge_t = edge_type.reshape(-1).astype(jnp.int32)

    tile = min(_MAX_TILE_ROWS, _round_up(max(n_nodes, n_edges), 32))
    n_node_tiles = pl.cdiv(n_nodes, tile)
    n_edge_tiles = pl.cdiv(n_edges, tile)
    grid_len = max(n_node_tiles, n_edge_tiles)

    # Exactly-sized int8 mask streams (zero tail rows; no per-element padding).
    node_msk = _exact_mask_stream(mask_to_nrme, atom_t, n_node_tiles * tile)
    edge_msk = _exact_mask_stream(mask_to_erme, edge_t, n_edge_tiles * tile)

    # Selected-element counts from the tiny per-type tables (plain JAX, #2).
    # Precondition (same as the PyTorch module): at least one selected element,
    # otherwise the mean degenerates (NaN), matching torch behaviour.
    node_cnt = jnp.sum(jnp.sum(mask_to_nrme.astype(jnp.float32), axis=1)[atom_t])
    edge_cnt = jnp.sum(jnp.sum(mask_to_erme.astype(jnp.float32), axis=1)[edge_t])

    node_map = lambda i: (jnp.minimum(i, n_node_tiles - 1), 0)
    edge_map = lambda i: (jnp.minimum(i, n_edge_tiles - 1), 0)

    kernel = functools.partial(_fused_stats_kernel,
                               n_node_tiles=n_node_tiles,
                               n_edge_tiles=n_edge_tiles,
                               grid_len=grid_len)

    stats = pl.pallas_call(
        kernel,
        out_shape=jax.ShapeDtypeStruct((4,), jnp.float32),
        grid_spec=pltpu.PrefetchScalarGridSpec(
            num_scalar_prefetch=0,
            grid=(grid_len,),
            in_specs=[
                pl.BlockSpec((tile, f_node), node_map),
                pl.BlockSpec((tile, f_node), node_map),
                pl.BlockSpec((tile, f_node), node_map),
                pl.BlockSpec((tile, f_edge), edge_map),
                pl.BlockSpec((tile, f_edge), edge_map),
                pl.BlockSpec((tile, f_edge), edge_map),
            ],
            out_specs=pl.BlockSpec(memory_space=pltpu.SMEM),
            scratch_shapes=[
                pltpu.VMEM((2, _ACC_ROWS, f_node), jnp.float32),
                pltpu.VMEM((2, _ACC_ROWS, f_edge), jnp.float32),
            ],
        ),
        compiler_params=pltpu.CompilerParams(
            dimension_semantics=("arbitrary",)),   # running accumulation
    )(node_pre, node_tgt, node_msk, edge_pre, edge_tgt, edge_msk)

    onsite_loss = 0.5 * (stats[0] / node_cnt + jnp.sqrt(stats[1] / node_cnt))
    hopping_loss = 0.5 * (stats[2] / edge_cnt + jnp.sqrt(stats[3] / edge_cnt))
    return 0.5 * (onsite_loss + hopping_loss)


# ----------------------------------------------------------------------------
# Pure-JAX reference (masked-mean form == torch boolean-select L1/MSE means).
# ----------------------------------------------------------------------------
def _reference(node_feats, ref_node_feats, atom_type,
               edge_feats, ref_edge_feats, edge_type,
               mask_to_nrme, mask_to_erme):
    def comp(pre_all, tgt_all, mask):
        m = mask.astype(jnp.float32)
        d = (pre_all - tgt_all) * m
        cnt = jnp.sum(m)
        l1 = jnp.sum(jnp.abs(d)) / cnt
        mse = jnp.sum(d * d) / cnt
        return 0.5 * (l1 + jnp.sqrt(mse))

    nm = mask_to_nrme[atom_type.reshape(-1)]
    em = mask_to_erme[edge_type.reshape(-1)]
    return 0.5 * (comp(node_feats, ref_node_feats, nm) +
                  comp(edge_feats, ref_edge_feats, em))


if __name__ == "__main__":
    key = jax.random.PRNGKey(0)
    k1, k2, k3, k4, k5, k6 = jax.random.split(key, 6)

    # small synthetic "AtomicDataDict" shapes
    n_nodes, n_atom_types, node_feat_dim = 10, 2, 13
    n_edges, n_bond_types, edge_feat_dim = 14, 3, 13

    node_feats = jax.random.normal(k1, (n_nodes, node_feat_dim), jnp.float32)
    ref_node_feats = jax.random.normal(k2, (n_nodes, node_feat_dim), jnp.float32)
    edge_feats = jax.random.normal(k3, (n_edges, edge_feat_dim), jnp.float32)
    ref_edge_feats = jax.random.normal(k4, (n_edges, edge_feat_dim), jnp.float32)

    atom_type = jax.random.randint(k5, (n_nodes, 1), 0, n_atom_types, jnp.int32)
    edge_type = jax.random.randint(k6, (n_edges, 1), 0, n_bond_types, jnp.int32)

    # deterministic synthetic OrbitalMapper masks (boolean tables per type)
    j_node = jnp.arange(node_feat_dim)
    mask_to_nrme = jnp.stack(
        [j_node < (5 + 4 * t) for t in range(n_atom_types)], axis=0)
    j_edge = jnp.arange(edge_feat_dim)
    mask_to_erme = jnp.stack(
        [(j_edge % (t + 2)) == 0 for t in range(n_bond_types)], axis=0)

    loss = hamil_loss_abs(node_feats, ref_node_feats, atom_type,
                          edge_feats, ref_edge_feats, edge_type,
                          mask_to_nrme, mask_to_erme)
    loss = jax.block_until_ready(loss)

    ref = _reference(node_feats, ref_node_feats, atom_type,
                     edge_feats, ref_edge_feats, edge_type,
                     mask_to_nrme, mask_to_erme)
    np.testing.assert_allclose(np.asarray(loss), np.asarray(ref),
                               rtol=1e-5, atol=1e-6)

    # Larger self-check: multi-tile grid, unequal node/edge tile counts
    # (exercises the pl.when gating + clamped index maps) and ragged last
    # blocks on both streams (exercises the jnp.where tail handling).
    kb = jax.random.split(jax.random.PRNGKey(1), 6)
    big_nn, big_ne = 2600, 5000          # -> 2 node tiles, 3 edge tiles @2048
    b_nf = jax.random.normal(kb[0], (big_nn, node_feat_dim), jnp.float32)
    b_nr = jax.random.normal(kb[1], (big_nn, node_feat_dim), jnp.float32)
    b_ef = jax.random.normal(kb[2], (big_ne, edge_feat_dim), jnp.float32)
    b_er = jax.random.normal(kb[3], (big_ne, edge_feat_dim), jnp.float32)
    b_at = jax.random.randint(kb[4], (big_nn, 1), 0, n_atom_types, jnp.int32)
    b_et = jax.random.randint(kb[5], (big_ne, 1), 0, n_bond_types, jnp.int32)

    big_loss = jax.block_until_ready(
        hamil_loss_abs(b_nf, b_nr, b_at, b_ef, b_er, b_et,
                       mask_to_nrme, mask_to_erme))
    big_ref = _reference(b_nf, b_nr, b_at, b_ef, b_er, b_et,
                         mask_to_nrme, mask_to_erme)
    np.testing.assert_allclose(np.asarray(big_loss), np.asarray(big_ref),
                               rtol=5e-5, atol=1e-5)

    print("KERNEL_OK")
</pallas_src>

<mosaic_0001>
module attributes {stable_mosaic.version = 11 : i64} {
  func.func @_fused_stats_kernel(%arg0: i32, %arg1: memref<32x13xf32, #tpu.memory_space<vmem>>, %arg2: memref<32x13xf32, #tpu.memory_space<vmem>>, %arg3: memref<32x13xi8, #tpu.memory_space<vmem>>, %arg4: memref<32x13xf32, #tpu.memory_space<vmem>>, %arg5: memref<32x13xf32, #tpu.memory_space<vmem>>, %arg6: memref<32x13xi8, #tpu.memory_space<vmem>>, %arg7: memref<4xf32, #tpu.memory_space<smem>>, %arg8: memref<2x8x13xf32, #tpu.memory_space<vmem>>, %arg9: memref<2x8x13xf32, #tpu.memory_space<vmem>>) attributes {dimension_semantics = [#tpu.dimension_semantics<arbitrary>], iteration_bounds = array<i64: 1>, scalar_prefetch = 0 : i64, scratch_operands = 2 : i64, tpu.core_type = #tpu.core_type<tc>, window_params = [{transform_indices = @transform_0, window_bounds = array<i64: 32, 13>}, {transform_indices = @transform_1, window_bounds = array<i64: 32, 13>}, {transform_indices = @transform_2, window_bounds = array<i64: 32, 13>}, {transform_indices = @transform_3, window_bounds = array<i64: 32, 13>}, {transform_indices = @transform_4, window_bounds = array<i64: 32, 13>}, {transform_indices = @transform_5, window_bounds = array<i64: 32, 13>}, {transform_indices = @transform_6, window_bounds = array<i64: 4>}]} {
    %c0_i32 = arith.constant 0 : i32
    %0 = arith.cmpi eq, %arg0, %c0_i32 : i32
    %1 = arith.extui %0 : i1 to i32
    %c0_i32_0 = arith.constant 0 : i32
    %2 = arith.cmpi ne, %1, %c0_i32_0 : i32
    scf.if %2 {
      %cst_44 = arith.constant 0.000000e+00 : f32
      %60 = vector.broadcast %cst_44 : f32 to vector<2x8x13xf32>
      %c0_45 = arith.constant 0 : index
      %c0_46 = arith.constant 0 : index
      %c0_47 = arith.constant 0 : index
      %61 = vector.load %arg8[%c0_45, %c0_46, %c0_47] : memref<2x8x13xf32, #tpu.memory_space<vmem>>, vector<2x8x13xf32>
      tpu.vector_store %arg8[%c0_45, %c0_46, %c0_47], %60 {strides = array<i32>} : memref<2x8x13xf32, #tpu.memory_space<vmem>>, vector<2x8x13xf32>,
      %cst_48 = arith.constant 0.000000e+00 : f32
      %62 = vector.broadcast %cst_48 : f32 to vector<2x8x13xf32>
      %c0_49 = arith.constant 0 : index
      %c0_50 = arith.constant 0 : index
      %c0_51 = arith.constant 0 : index
      %63 = vector.load %arg9[%c0_49, %c0_50, %c0_51] : memref<2x8x13xf32, #tpu.memory_space<vmem>>, vector<2x8x13xf32>
      tpu.vector_store %arg9[%c0_49, %c0_50, %c0_51], %62 {strides = array<i32>} : memref<2x8x13xf32, #tpu.memory_space<vmem>>, vector<2x8x13xf32>,
    } else {
    }
    %c0 = arith.constant 0 : index
    %c0_1 = arith.constant 0 : index
    %3 = vector.load %arg1[%c0, %c0_1] : memref<32x13xf32, #tpu.memory_space<vmem>>, vector<32x13xf32>
    %c0_2 = arith.constant 0 : index
    %c0_3 = arith.constant 0 : index
    %4 = vector.load %arg2[%c0_2, %c0_3] : memref<32x13xf32, #tpu.memory_space<vmem>>, vector<32x13xf32>
    %5 = arith.subf %3, %4 : vector<32x13xf32>
    %c0_4 = arith.constant 0 : index
    %c0_5 = arith.constant 0 : index
    %6 = vector.load %arg3[%c0_4, %c0_5] : memref<32x13xi8, #tpu.memory_space<vmem>>, vector<32x13xi8>
    %7 = arith.sitofp %6 : vector<32x13xi8> to vector<32x13xf32>
    %cst = arith.constant 0.000000e+00 : f32
    %8 = vector.broadcast %cst : f32 to vector<32x13xf32>
    %9 = arith.cmpf one, %7, %8 : vector<32x13xf32>
    %cst_6 = arith.constant 0.000000e+00 : f32
    %10 = vector.broadcast %cst_6 : f32 to vector<32x13xf32>
    %11 = arith.select %9, %5, %10 : vector<32x13xi1>, vector<32x13xf32>
    %c0_7 = arith.constant 0 : index
    %c0_8 = arith.constant 0 : index
    %c0_9 = arith.constant 0 : index
    %12 = vector.load %arg8[%c0_7, %c0_8, %c0_9] : memref<2x8x13xf32, #tpu.memory_space<vmem>>, vector<1x8x13xf32>
    %13 = vector.shape_cast %12 : vector<1x8x13xf32> to vector<8x13xf32>
    %14 = math.absf %11 : vector<32x13xf32>
    %15 = vector.shape_cast %14 : vector<32x13xf32> to vector<4x8x13xf32>
    %cst_10 = arith.constant dense<0.000000e+00> : vector<8x13xf32>
    %16 = vector.multi_reduction <add>, %15, %cst_10 [0] : vector<4x8x13xf32> to vector<8x13xf32>
    %17 = arith.addf %13, %16 : vector<8x13xf32>
    %c0_11 = arith.constant 0 : index
    %c0_12 = arith.constant 0 : index
    %c0_13 = arith.constant 0 : index
    %18 = vector.load %arg8[%c0_11, %c0_12, %c0_13] : memref<2x8x13xf32, #tpu.memory_space<vmem>>, vector<1x8x13xf32>
    %19 = vector.shape_cast %18 : vector<1x8x13xf32> to vector<8x13xf32>
    %20 = vector.shape_cast %17 : vector<8x13xf32> to vector<1x8x13xf32>
    tpu.vector_store %arg8[%c0_11, %c0_12, %c0_13], %20 {strides = array<i32>} : memref<2x8x13xf32, #tpu.memory_space<vmem>>, vector<1x8x13xf32>,
    %c1 = arith.constant 1 : index
    %c0_14 = arith.constant 0 : index
    %c0_15 = arith.constant 0 : index
    %21 = vector.load %arg8[%c1, %c0_14, %c0_15] : memref<2x8x13xf32, #tpu.memory_space<vmem>>, vector<1x8x13xf32>
    %22 = vector.shape_cast %21 : vector<1x8x13xf32> to vector<8x13xf32>
    %23 = arith.mulf %11, %11 : vector<32x13xf32>
    %24 = vector.shape_cast %23 : vector<32x13xf32> to vector<4x8x13xf32>
    %cst_16 = arith.constant dense<0.000000e+00> : vector<8x13xf32>
    %25 = vector.multi_reduction <add>, %24, %cst_16 [0] : vector<4x8x13xf32> to vector<8x13xf32>
    %26 = arith.addf %22, %25 : vector<8x13xf32>
    %c1_17 = arith.constant 1 : index
    %c0_18 = arith.constant 0 : index
    %c0_19 = arith.constant 0 : index
    %27 = vector.load %arg8[%c1_17, %c0_18, %c0_19] : memref<2x8x13xf32, #tpu.memory_space<vmem>>, vector<1x8x13xf32>
    %28 = vector.shape_cast %27 : vector<1x8x13xf32> to vector<8x13xf32>
    %29 = vector.shape_cast %26 : vector<8x13xf32> to vector<1x8x13xf32>
    tpu.vector_store %arg8[%c1_17, %c0_18, %c0_19], %29 {strides = array<i32>} : memref<2x8x13xf32, #tpu.memory_space<vmem>>, vector<1x8x13xf32>,
    %c0_20 = arith.constant 0 : index
    %c0_21 = arith.constant 0 : index
    %30 = vector.load %arg4[%c0_20, %c0_21] : memref<32x13xf32, #tpu.memory_space<vmem>>, vector<32x13xf32>
    %c0_22 = arith.constant 0 : index
    %c0_23 = arith.constant 0 : index
    %31 = vector.load %arg5[%c0_22, %c0_23] : memref<32x13xf32, #tpu.memory_space<vmem>>, vector<32x13xf32>
    %32 = arith.subf %30, %31 : vector<32x13xf32>
    %c0_24 = arith.constant 0 : index
    %c0_25 = arith.constant 0 : index
    %33 = vector.load %arg6[%c0_24, %c0_25] : memref<32x13xi8, #tpu.memory_space<vmem>>, vector<32x13xi8>
    %34 = arith.sitofp %33 : vector<32x13xi8> to vector<32x13xf32>
    %cst_26 = arith.constant 0.000000e+00 : f32
    %35 = vector.broadcast %cst_26 : f32 to vector<32x13xf32>
    %36 = arith.cmpf one, %34, %35 : vector<32x13xf32>
    %cst_27 = arith.constant 0.000000e+00 : f32
    %37 = vector.broadcast %cst_27 : f32 to vector<32x13xf32>
    %38 = arith.select %36, %32, %37 : vector<32x13xi1>, vector<32x13xf32>
    %c0_28 = arith.constant 0 : index
    %c0_29 = arith.constant 0 : index
    %c0_30 = arith.constant 0 : index
    %39 = vector.load %arg9[%c0_28, %c0_29, %c0_30] : memref<2x8x13xf32, #tpu.memory_space<vmem>>, vector<1x8x13xf32>
    %40 = vector.shape_cast %39 : vector<1x8x13xf32> to vector<8x13xf32>
    %41 = math.absf %38 : vector<32x13xf32>
    %42 = vector.shape_cast %41 : vector<32x13xf32> to vector<4x8x13xf32>
    %cst_31 = arith.constant dense<0.000000e+00> : vector<8x13xf32>
    %43 = vector.multi_reduction <add>, %42, %cst_31 [0] : vector<4x8x13xf32> to vector<8x13xf32>
    %44 = arith.addf %40, %43 : vector<8x13xf32>
    %c0_32 = arith.constant 0 : index
    %c0_33 = arith.constant 0 : index
    %c0_34 = arith.constant 0 : index
    %45 = vector.load %arg9[%c0_32, %c0_33, %c0_34] : memref<2x8x13xf32, #tpu.memory_space<vmem>>, vector<1x8x13xf32>
    %46 = vector.shape_cast %45 : vector<1x8x13xf32> to vector<8x13xf32>
    %47 = vector.shape_cast %44 : vector<8x13xf32> to vector<1x8x13xf32>
    tpu.vector_store %arg9[%c0_32, %c0_33, %c0_34], %47 {strides = array<i32>} : memref<2x8x13xf32, #tpu.memory_space<vmem>>, vector<1x8x13xf32>,
    %c1_35 = arith.constant 1 : index
    %c0_36 = arith.constant 0 : index
    %c0_37 = arith.constant 0 : index
    %48 = vector.load %arg9[%c1_35, %c0_36, %c0_37] : memref<2x8x13xf32, #tpu.memory_space<vmem>>, vector<1x8x13xf32>
    %49 = vector.shape_cast %48 : vector<1x8x13xf32> to vector<8x13xf32>
    %50 = arith.mulf %38, %38 : vector<32x13xf32>
    %51 = vector.shape_cast %50 : vector<32x13xf32> to vector<4x8x13xf32>
    %cst_38 = arith.constant dense<0.000000e+00> : vector<8x13xf32>
    %52 = vector.multi_reduction <add>, %51, %cst_38 [0] : vector<4x8x13xf32> to vector<8x13xf32>
    %53 = arith.addf %49, %52 : vector<8x13xf32>
    %c1_39 = arith.constant 1 : index
    %c0_40 = arith.constant 0 : index
    %c0_41 = arith.constant 0 : index
    %54 = vector.load %arg9[%c1_39, %c0_40, %c0_41] : memref<2x8x13xf32, #tpu.memory_space<vmem>>, vector<1x8x13xf32>
    %55 = vector.shape_cast %54 : vector<1x8x13xf32> to vector<8x13xf32>
    %56 = vector.shape_cast %53 : vector<8x13xf32> to vector<1x8x13xf32>
    tpu.vector_store %arg9[%c1_39, %c0_40, %c0_41], %56 {strides = array<i32>} : memref<2x8x13xf32, #tpu.memory_space<vmem>>, vector<1x8x13xf32>,
    %c0_i32_42 = arith.constant 0 : i32
    %57 = arith.cmpi eq, %arg0, %c0_i32_42 : i32
    %58 = arith.extui %57 : i1 to i32
    %c0_i32_43 = arith.constant 0 : i32
    %59 = arith.cmpi ne, %58, %c0_i32_43 : i32
    scf.if %59 {
      %c0_44 = arith.constant 0 : index
      %c0_45 = arith.constant 0 : index
      %c0_46 = arith.constant 0 : index
      %60 = vector.load %arg8[%c0_44, %c0_45, %c0_46] : memref<2x8x13xf32, #tpu.memory_space<vmem>>, vector<1x8x13xf32>
      %61 = vector.shape_cast %60 : vector<1x8x13xf32> to vector<8x13xf32>
      %62 = vector.shape_cast %61 : vector<8x13xf32> to vector<1x8x13xf32>
      %cst_47 = arith.constant dense<0.000000e+00> : vector<1xf32>
      %63 = vector.multi_reduction <add>, %62, %cst_47 [1, 2] : vector<1x8x13xf32> to vector<1xf32>
      %64 = vector.shape_cast %63 : vector<1xf32> to vector<1x1x1xf32>
      %65 = vector.extract %64[0, 0, 0] : f32 from vector<1x1x1xf32>
      %c0_48 = arith.constant 0 : index
      %66 = memref.load %arg7[%c0_48] : memref<4xf32, #tpu.memory_space<smem>>
      memref.store %65, %arg7[%c0_48] : memref<4xf32, #tpu.memory_space<smem>>
      %c1_49 = arith.constant 1 : index
      %c0_50 = arith.constant 0 : index
      %c0_51 = arith.constant 0 : index
      %67 = vector.load %arg8[%c1_49, %c0_50, %c0_51] : memref<2x8x13xf32, #tpu.memory_space<vmem>>, vector<1x8x13xf32>
      %68 = vector.shape_cast %67 : vector<1x8x13xf32> to vector<8x13xf32>
      %69 = vector.shape_cast %68 : vector<8x13xf32> to vector<1x8x13xf32>
      %cst_52 = arith.constant dense<0.000000e+00> : vector<1xf32>
      %70 = vector.multi_reduction <add>, %69, %cst_52 [1, 2] : vector<1x8x13xf32> to vector<1xf32>
      %71 = vector.shape_cast %70 : vector<1xf32> to vector<1x1x1xf32>
      %72 = vector.extract %71[0, 0, 0] : f32 from vector<1x1x1xf32>
      %c1_53 = arith.constant 1 : index
      %73 = memref.load %arg7[%c1_53] : memref<4xf32, #tpu.memory_space<smem>>
      memref.store %72, %arg7[%c1_53] : memref<4xf32, #tpu.memory_space<smem>>
      %c0_54 = arith.constant 0 : index
      %c0_55 = arith.constant 0 : index
      %c0_56 = arith.constant 0 : index
      %74 = vector.load %arg9[%c0_54, %c0_55, %c0_56] : memref<2x8x13xf32, #tpu.memory_space<vmem>>, vector<1x8x13xf32>
      %75 = vector.shape_cast %74 : vector<1x8x13xf32> to vector<8x13xf32>
      %76 = vector.shape_cast %75 : vector<8x13xf32> to vector<1x8x13xf32>
      %cst_57 = arith.constant dense<0.000000e+00> : vector<1xf32>
      %77 = vector.multi_reduction <add>, %76, %cst_57 [1, 2] : vector<1x8x13xf32> to vector<1xf32>
      %78 = vector.shape_cast %77 : vector<1xf32> to vector<1x1x1xf32>
      %79 = vector.extract %78[0, 0, 0] : f32 from vector<1x1x1xf32>
      %c2 = arith.constant 2 : index
      %80 = memref.load %arg7[%c2] : memref<4xf32, #tpu.memory_space<smem>>
      memref.store %79, %arg7[%c2] : memref<4xf32, #tpu.memory_space<smem>>
      %c1_58 = arith.constant 1 : index
      %c0_59 = arith.constant 0 : index
      %c0_60 = arith.constant 0 : index
      %81 = vector.load %arg9[%c1_58, %c0_59, %c0_60] : memref<2x8x13xf32, #tpu.memory_space<vmem>>, vector<1x8x13xf32>
      %82 = vector.shape_cast %81 : vector<1x8x13xf32> to vector<8x13xf32>
      %83 = vector.shape_cast %82 : vector<8x13xf32> to vector<1x8x13xf32>
      %cst_61 = arith.constant dense<0.000000e+00> : vector<1xf32>
      %84 = vector.multi_reduction <add>, %83, %cst_61 [1, 2] : vector<1x8x13xf32> to vector<1xf32>
      %85 = vector.shape_cast %84 : vector<1xf32> to vector<1x1x1xf32>
      %86 = vector.extract %85[0, 0, 0] : f32 from vector<1x1x1xf32>
      %c3 = arith.constant 3 : index
      %87 = memref.load %arg7[%c3] : memref<4xf32, #tpu.memory_space<smem>>
      memref.store %86, %arg7[%c3] : memref<4xf32, #tpu.memory_space<smem>>
    } else {
    }
    return
  }
  func.func @transform_0(%arg0: i32) -> (i32, i32) {
    %c0_i32 = arith.constant 0 : i32
    %0 = arith.minsi %arg0, %c0_i32 : i32
    %c0_i32_0 = arith.constant 0 : i32
    %c0_i32_1 = arith.constant 0 : i32
    return %0, %c0_i32_0 : i32, i32
  }
  func.func @transform_1(%arg0: i32) -> (i32, i32) {
    %c0_i32 = arith.constant 0 : i32
    %0 = arith.minsi %arg0, %c0_i32 : i32
    %c0_i32_0 = arith.constant 0 : i32
    %c0_i32_1 = arith.constant 0 : i32
    return %0, %c0_i32_0 : i32, i32
  }
  func.func @transform_2(%arg0: i32) -> (i32, i32) {
    %c0_i32 = arith.constant 0 : i32
    %0 = arith.minsi %arg0, %c0_i32 : i32
    %c0_i32_0 = arith.constant 0 : i32
    %c0_i32_1 = arith.constant 0 : i32
    return %0, %c0_i32_0 : i32, i32
  }
  func.func @transform_3(%arg0: i32) -> (i32, i32) {
    %c0_i32 = arith.constant 0 : i32
    %0 = arith.minsi %arg0, %c0_i32 : i32
    %c0_i32_0 = arith.constant 0 : i32
    %c0_i32_1 = arith.constant 0 : i32
    return %0, %c0_i32_0 : i32, i32
  }
  func.func @transform_4(%arg0: i32) -> (i32, i32) {
    %c0_i32 = arith.constant 0 : i32
    %0 = arith.minsi %arg0, %c0_i32 : i32
    %c0_i32_0 = arith.constant 0 : i32
    %c0_i32_1 = arith.constant 0 : i32
    return %0, %c0_i32_0 : i32, i32
  }
  func.func @transform_5(%arg0: i32) -> (i32, i32) {
    %c0_i32 = arith.constant 0 : i32
    %0 = arith.minsi %arg0, %c0_i32 : i32
    %c0_i32_0 = arith.constant 0 : i32
    %c0_i32_1 = arith.constant 0 : i32
    return %0, %c0_i32_0 : i32, i32
  }
  func.func @transform_6(%arg0: i32) -> i32 {
    %c0_i32 = arith.constant 0 : i32
    %c0_i32_0 = arith.constant 0 : i32
    return %c0_i32 : i32
  }
}

</mosaic_0001>

<llo_original>
// kernel: hamil_loss_abs.1
$region0: #{hamil_loss_abs.1}
  #allocation0 [shape = 'u32[]', space=smem, size = 0x4, offset = 0x4, fixed_abs, tag = 'smem constant byte address 0x4 - core index']
  #allocation1 [shape = 'u32[144,128]{1,0:T(1,128)}', space=vmem, size = 0x12000, scoped, tag = 'internal scratch']
  #allocation2 [shape = 'f32[2,8,13]{2,1,0:T(8,128)}', space=vmem, size = 0x2000, scoped, tag = 'scratch operand']
  #allocation3 [shape = 'f32[2,8,13]{2,1,0:T(8,128)}', space=vmem, size = 0x2000, scoped, tag = 'scratch operand']
  %s0 = inlined_call_operand.vmem [shape: f32[10,13], index: 0, kind: input, shape index: {}]
  %s1 = inlined_call_operand.vmem [shape: f32[10,13], index: 1, kind: input, shape index: {}]
  %s2 = inlined_call_operand.vmem [shape: s8[32,13], index: 2, kind: input, shape index: {}]
  %s3 = inlined_call_operand.vmem [shape: f32[14,13], index: 3, kind: input, shape index: {}]
  %s4 = inlined_call_operand.vmem [shape: f32[14,13], index: 4, kind: input, shape index: {}]
  %s5 = inlined_call_operand.vmem [shape: s8[32,13], index: 5, kind: input, shape index: {}]
  %s6 = inlined_call_operand.vmem [shape: f32[4], index: 6, kind: output, shape index: {}]
  %s7 = sld [smem:[#allocation0]]
  $region42: #{hamil_loss_abs.1} parent=0
    _
  %s9 = ssub.s32 1, %s7
  %s10 = scalar_select 0, %s9, %s7
  $region1: #{hamil_loss_abs.1} parent=0
    #allocation4 [shape = 'u8[512]{0}', space=smem, size = 0x200, scoped, tag = 'output window, operand 0, single buffered']
    #allocation5 [shape = 's32[1]{0}', space=sflag, size = 0x4, scoped, tag = 'scoped memory for hamil_loss_abs.1']
    %11 = vsyncpa [#allocation5], 0
    // Predicated region
    $region2: #{hamil_loss_abs.1} parent=1 // pred_check
      _
    $region3: #{hamil_loss_abs.1} parent=1 // pred_check_branch
      %13 = sbr.rel (0) target = $region5
    $region4: #{hamil_loss_abs.1} parent=1 // pred_region
      _
    $region5: #{hamil_loss_abs.1} parent=1 // pred_fallthru
      _
    // Predicated region
    $region6: #{hamil_loss_abs.1} parent=1 // pred_check
      _
    $region7: #{hamil_loss_abs.1} parent=1 // pred_check_branch
      %15 = sbr.rel (0) target = $region9
    $region8: #{hamil_loss_abs.1} parent=1 // pred_region
      _
    $region9: #{hamil_loss_abs.1} parent=1 // pred_fallthru
      _
    // Predicated region
    $region10: #{hamil_loss_abs.1} parent=1 // pred_check
      _
    $region11: #{hamil_loss_abs.1} parent=1 // pred_check_branch
      %17 = sbr.rel (0) target = $region13
    $region12: #{hamil_loss_abs.1} parent=1 // pred_region
      _
    $region13: #{hamil_loss_abs.1} parent=1 // pred_fallthru
      _
    // Predicated region
    $region14: #{hamil_loss_abs.1} parent=1 // pred_check
      _
    $region15: #{hamil_loss_abs.1} parent=1 // pred_check_branch
      %19 = sbr.rel (0) target = $region17
    $region16: #{hamil_loss_abs.1} parent=1 // pred_region
      _
    $region17: #{hamil_loss_abs.1} parent=1 // pred_fallthru
      _
    // Predicated region
    $region18: #{hamil_loss_abs.1} parent=1 // pred_check
      _
    $region19: #{hamil_loss_abs.1} parent=1 // pred_check_branch
      %21 = sbr.rel (0) target = $region21
    $region20: #{hamil_loss_abs.1} parent=1 // pred_region
      _
    $region21: #{hamil_loss_abs.1} parent=1 // pred_fallthru
      _
    // Predicated region
    $region22: #{hamil_loss_abs.1} parent=1 // pred_check
      _
    $region23: #{hamil_loss_abs.1} parent=1 // pred_check_branch
      %23 = sbr.rel (0) target = $region25
    $region24: #{hamil_loss_abs.1} parent=1 // pred_region
      _
    $region25: #{hamil_loss_abs.1} parent=1 // pred_fallthru
      _
    %p24 = scmp.eq.s32.totalorder 0, 0
    // Predicated region
    $region26: #{hamil_loss_abs.1} parent=1 // pred_check
      %p25 = pneg %p24
    $region27: #{hamil_loss_abs.1} parent=1 // pred_check_branch
      %27 = sbr.rel (%p25) target = $region29
    $region28: #{hamil_loss_abs.1} parent=1 // pred_region
      %vm28 = vcmask 105472
      %29 = vst.msk [vmem:[#allocation2] sm:$0xff] %vm28, 0.0
      %30 = vst.msk [vmem:[#allocation2 + $0x8] sm:$0xff] %vm28, 0.0
      %31 = vst.msk [vmem:[#allocation3] sm:$0xff] %vm28, 0.0
      %32 = vst.msk [vmem:[#allocation3 + $0x8] sm:$0xff] %vm28, 0.0
    $region29: #{hamil_loss_abs.1} parent=1 // pred_fallthru
      _
    %v33 = vld [vmem:[%s0] sm:$0xff]
    %v34 = vld [vmem:[%s0 + $0x8] sm:$0xff]
    %v35 = vld [vmem:[%s0 + $0x10] sm:$0xff]
    %v36 = vld [vmem:[%s0 + $0x18] sm:$0xff]
    %v37 = vld [vmem:[%s1] sm:$0xff]
    %v38 = vld [vmem:[%s1 + $0x8] sm:$0xff]
    %v39 = vld [vmem:[%s1 + $0x10] sm:$0xff]
    %v40 = vld [vmem:[%s1 + $0x18] sm:$0xff]
    %v41 = vsub.f32 %v33, %v37
    %v42 = vsub.f32 %v34, %v38
    %v43 = vsub.f32 %v35, %v39
    %v44 = vsub.f32 %v36, %v40
    %v45 = vld [vmem:[%s2] sm:$0xff]
    %v46 = vunpack.c.0.s8 %v45
    %v47 = vunpack.c.1.s8 %v45
    %v48 = vunpack.c.2.s8 %v45
    %v49 = vunpack.c.3.s8 %v45
    %v50 = vcvt.s32.f32 %v46
    %v51 = vcvt.s32.f32 %v47
    %v52 = vcvt.s32.f32 %v48
    %v53 = vcvt.s32.f32 %v49
    %vm54 = vcmp.ne.f32.partialorder %v50, 0.0
    %vm55 = vcmp.ne.f32.partialorder %v51, 0.0
    %vm56 = vcmp.ne.f32.partialorder %v52, 0.0
    %vm57 = vcmp.ne.f32.partialorder %v53, 0.0
    %v58 = vsel %vm54, %v41, 0.0
    %v59 = vsel %vm55, %v42, 0.0
    %v60 = vsel %vm56, %v43, 0.0
    %v61 = vsel %vm57, %v44, 0.0
    %v62 = vld [vmem:[#allocation2] sm:$0xff]
    %v63 = vand.u32 2147483647, %v58
    %v64 = vand.u32 2147483647, %v59
    %v65 = vand.u32 2147483647, %v60
    %v66 = vand.u32 2147483647, %v61
    %vm67 = vcmask 105472
    %v68 = vsel %vm67, %v63, 0.0
    %v69 = vsel %vm67, %v64, 0.0
    %v70 = vadd.f32 %v68, %v69
    %v71 = vsel %vm67, %v65, 0.0
    %v72 = vadd.f32 %v70, %v71
    %v73 = vsel %vm67, %v66, 0.0
    %v74 = vadd.f32 %v72, %v73
    %v75 = vadd.f32 %v62, %v74
    %76 = vst.msk [vmem:[#allocation2] sm:$0xff] %vm67, %v75
    %s77 = scalar_lea.vmem [#allocation2], 8
    %v78 = vld [vmem:[%s77] sm:$0xff]
    %v79 = vmul.f32 %v58, %v58
    %v80 = vmul.f32 %v59, %v59
    %v81 = vmul.f32 %v60, %v60
    %v82 = vmul.f32 %v61, %v61
    %v83 = vsel %vm67, %v79, 0.0
    %v84 = vsel %vm67, %v80, 0.0
    %v85 = vadd.f32 %v83, %v84
    %v86 = vsel %vm67, %v81, 0.0
    %v87 = vadd.f32 %v85, %v86
    %v88 = vsel %vm67, %v82, 0.0
    %v89 = vadd.f32 %v87, %v88
    %v90 = vadd.f32 %v78, %v89
    %91 = vst.msk [vmem:[%s77] sm:$0xff] %vm67, %v90
    %v92 = vld [vmem:[%s3] sm:$0xff]
    %v93 = vld [vmem:[%s3 + $0x8] sm:$0xff]
    %v94 = vld [vmem:[%s3 + $0x10] sm:$0xff]
    %v95 = vld [vmem:[%s3 + $0x18] sm:$0xff]
    %v96 = vld [vmem:[%s4] sm:$0xff]
    %v97 = vld [vmem:[%s4 + $0x8] sm:$0xff]
    %v98 = vld [vmem:[%s4 + $0x10] sm:$0xff]
    %v99 = vld [vmem:[%s4 + $0x18] sm:$0xff]
    %v100 = vsub.f32 %v92, %v96
    %v101 = vsub.f32 %v93, %v97
    %v102 = vsub.f32 %v94, %v98
    %v103 = vsub.f32 %v95, %v99
    %v104 = vld [vmem:[%s5] sm:$0xff]
    %v105 = vunpack.c.0.s8 %v104
    %v106 = vunpack.c.1.s8 %v104
    %v107 = vunpack.c.2.s8 %v104
    %v108 = vunpack.c.3.s8 %v104
    %v109 = vcvt.s32.f32 %v105
    %v110 = vcvt.s32.f32 %v106
    %v111 = vcvt.s32.f32 %v107
    %v112 = vcvt.s32.f32 %v108
    %vm113 = vcmp.ne.f32.partialorder %v109, 0.0
    %vm114 = vcmp.ne.f32.partialorder %v110, 0.0
    %vm115 = vcmp.ne.f32.partialorder %v111, 0.0
    %vm116 = vcmp.ne.f32.partialorder %v112, 0.0
    %v117 = vsel %vm113, %v100, 0.0
    %v118 = vsel %vm114, %v101, 0.0
    %v119 = vsel %vm115, %v102, 0.0
    %v120 = vsel %vm116, %v103, 0.0
    %v121 = vld [vmem:[#allocation3] sm:$0xff]
    %v122 = vand.u32 2147483647, %v117
    %v123 = vand.u32 2147483647, %v118
    %v124 = vand.u32 2147483647, %v119
    %v125 = vand.u32 2147483647, %v120
    %v126 = vsel %vm67, %v122, 0.0
    %v127 = vsel %vm67, %v123, 0.0
    %v128 = vadd.f32 %v126, %v127
    %v129 = vsel %vm67, %v124, 0.0
    %v130 = vadd.f32 %v128, %v129
    %v131 = vsel %vm67, %v125, 0.0
    %v132 = vadd.f32 %v130, %v131
    %v133 = vadd.f32 %v121, %v132
    %134 = vst.msk [vmem:[#allocation3] sm:$0xff] %vm67, %v133
    %s135 = scalar_lea.vmem [#allocation3], 8
    %v136 = vld [vmem:[%s135] sm:$0xff]
    %v137 = vmul.f32 %v117, %v117
    %v138 = vmul.f32 %v118, %v118
    %v139 = vmul.f32 %v119, %v119
    %v140 = vmul.f32 %v120, %v120
    %v141 = vsel %vm67, %v137, 0.0
    %v142 = vsel %vm67, %v138, 0.0
    %v143 = vadd.f32 %v141, %v142
    %v144 = vsel %vm67, %v139, 0.0
    %v145 = vadd.f32 %v143, %v144
    %v146 = vsel %vm67, %v140, 0.0
    %v147 = vadd.f32 %v145, %v146
    %v148 = vadd.f32 %v136, %v147
    %149 = vst.msk [vmem:[%s135] sm:$0xff] %vm67, %v148
    // Predicated region
    $region30: #{hamil_loss_abs.1} parent=1 // pred_check
      %p150 = pneg %p24
    $region31: #{hamil_loss_abs.1} parent=1 // pred_check_branch
      %152 = sbr.rel (%p150) target = $region33
    $region32: #{hamil_loss_abs.1} parent=1 // pred_region
      %v153 = vld [vmem:[#allocation2] sm:$0xff]
      %v154 = vsel %vm67, %v153, 0.0
      %155 = vadd.xlane.f32.xlu0 %v154
      %v156 = vpop.xlane.xlu0 %155
      %v157 = vrot.slane %v156, 4
      %v158 = vadd.f32 %v156, %v157
      %v159 = vrot.slane %v158, 2
      %v160 = vadd.f32 %v158, %v159
      %v161 = vrot.slane %v160, 1
      %v162 = vadd.f32 %v160, %v161
      %s163 = vtos %v162
      %s164 = scalar_lea.smem [#allocation4], 0
      %165 = sst [smem:[%s164]] %s163
      %v166 = vld [vmem:[%s77] sm:$0xff]
      %v167 = vsel %vm67, %v166, 0.0
      %168 = vadd.xlane.f32.xlu0 %v167
      %v169 = vpop.xlane.xlu0 %168
      %v170 = vrot.slane %v169, 4
      %v171 = vadd.f32 %v169, %v170
      %v172 = vrot.slane %v171, 2
      %v173 = vadd.f32 %v171, %v172
      %v174 = vrot.slane %v173, 1
      %v175 = vadd.f32 %v173, %v174
      %s176 = vtos %v175
      %s177 = scalar_lea.smem [#allocation4], 1
      %178 = sst [smem:[%s177]] %s176
      %v179 = vld [vmem:[#allocation3] sm:$0xff]
      %v180 = vsel %vm67, %v179, 0.0
      %181 = vadd.xlane.f32.xlu0 %v180
      %v182 = vpop.xlane.xlu0 %181
      %v183 = vrot.slane %v182, 4
      %v184 = vadd.f32 %v182, %v183
      %v185 = vrot.slane %v184, 2
      %v186 = vadd.f32 %v184, %v185
      %v187 = vrot.slane %v186, 1
      %v188 = vadd.f32 %v186, %v187
      %s189 = vtos %v188
      %s190 = scalar_lea.smem [#allocation4], 2
      %191 = sst [smem:[%s190]] %s189
      %v192 = vld [vmem:[%s135] sm:$0xff]
      %v193 = vsel %vm67, %v192, 0.0
      %194 = vadd.xlane.f32.xlu0 %v193
      %v195 = vpop.xlane.xlu0 %194
      %v196 = vrot.slane %v195, 4
      %v197 = vadd.f32 %v195, %v196
      %v198 = vrot.slane %v197, 2
      %v199 = vadd.f32 %v197, %v198
      %v200 = vrot.slane %v199, 1
      %v201 = vadd.f32 %v199, %v200
      %s202 = vtos %v201
      %s203 = scalar_lea.smem [#allocation4], 3
      %204 = sst [smem:[%s203]] %s202
    $region33: #{hamil_loss_abs.1} parent=1 // pred_fallthru
      _
    // Predicated region
    $region34: #{hamil_loss_abs.1} parent=1 // pred_check
      _
    $region35: #{hamil_loss_abs.1} parent=1 // pred_check_branch
      %206 = sbr.rel (0) target = $region37
    $region36: #{hamil_loss_abs.1} parent=1 // pred_region
      %s208 = ssub.s32 16, 16
      %209 = vsyncadd [#allocation5], %s208
      %s211 = sshll.u32 %s6, 4
      %s212 = int_to_ptr.vmem [resolvable:$true] %s211
      %214 = dma.smem_to_vmem [#allocation4], 16, %s212, [#allocation5]
    $region37: #{hamil_loss_abs.1} parent=1 // pred_fallthru
      _
    // Predicated region
    $region38: #{hamil_loss_abs.1} parent=1 // pred_check
      _
    $region39: #{hamil_loss_abs.1} parent=1 // pred_check_branch
      %216 = sbr.rel (0) target = $region41
    $region40: #{hamil_loss_abs.1} parent=1 // pred_region
      %217 = dma.done [#allocation5], 16
    $region41: #{hamil_loss_abs.1} parent=1 // pred_fallthru
      _
    %218 = sfence
    %219 = vsyncpa [#allocation5], 1

</llo_original>
